<compile_context>
chip_gen: v6e
topology: v6e:2x2x1
jax: 0.10.0
libtpu: 0.0.40
codegen_flags: <defaults>
</compile_context>

<pallas_src>
import functools

import jax
import jax.numpy as jnp
from jax.experimental import pallas as pl
from jax.experimental.pallas import tpu as pltpu

LN_EPS = 1e-5


def _round_up(n, m):
    return ((n + m - 1) // m) * m


def _ffn_kernel(x_ref, gamma_ref, beta_ref, w1_ref, b1_ref, w2_ref, b2_ref,
                o_ref):
    # x_ref: (TM, D) tile of tokens; weights/biases are grid-invariant blocks.

    # ---- LayerNorm over last dim, single-pass stats in f32 (eps = 1e-5).
    x = x_ref[...].astype(jnp.float32)
    mean = jnp.mean(x, axis=-1, keepdims=True)
    mean_sq = jnp.mean(x * x, axis=-1, keepdims=True)
    var = mean_sq - mean * mean
    inv = jax.lax.rsqrt(var + LN_EPS)
    xn = (x - mean) * inv
    xn = xn * gamma_ref[...].astype(jnp.float32) \
            + beta_ref[...].astype(jnp.float32)

    # ---- Linear(dim -> hidden): bf16 operands into the MXU, f32 accumulation.
    h = jnp.dot(xn.astype(w1_ref.dtype), w1_ref[...],
                preferred_element_type=jnp.float32)
    h = h + b1_ref[...].astype(jnp.float32)

    # ---- GELU: tanh approximation -> EUP slot (VPU stays free for the rest).
    # torch.nn.GELU() default is the erf form; deviation is ~1e-3 level.
    h = jax.nn.gelu(h, approximate=True)

    # ---- Linear(hidden -> dim)
    y = jnp.dot(h.astype(w2_ref.dtype), w2_ref[...],
                preferred_element_type=jnp.float32)
    y = y + b2_ref[...].astype(jnp.float32)

    o_ref[...] = y.astype(o_ref.dtype)


@functools.partial(jax.jit, static_argnames=("tile_m",))
def feed_forward(x, params, *, tile_m=512):
    """x: (batch, seq, dim). Returns same shape/dtype."""
    gamma, beta, w1, b1, w2, b2 = (
        params["ln_gamma"], params["ln_beta"],
        params["w1"], params["b1"], params["w2"], params["b2"])
    B, S, D = x.shape
    H = w1.shape[1]
    M = B * S

    # Row tile: multiple of the sublane packing (8 rows f32, 16 rows bf16),
    # clamped to the row count.
    sub = 16 if x.dtype == jnp.bfloat16 else 8
    tm = max(sub, min(tile_m, _round_up(M, sub)))
    tm = _round_up(tm, sub)
    # Keep >=2 grid steps when possible so ("parallel",) shards the row grid
    # across both v7x TensorCores (no effect when M is large vs tile_m).
    if M > sub:
        tm = max(sub, min(tm, _round_up(pl.cdiv(M, 2), sub)))

    grid = (pl.cdiv(M, tm),)

    x2d = x.reshape(M, D)

    # Biases / LN params kept 2-D (1, N) so the last-two-dims tiling rule holds.
    gamma2 = gamma.reshape(1, D)
    beta2 = beta.reshape(1, D)
    b1_2 = b1.reshape(1, H)
    b2_2 = b2.reshape(1, D)

    # ---- VMEM budget: weights single-buffered, x/out double-buffered, plus
    # the f32 (tm, H) / (tm, D) intermediates; cap at physical - 8 MiB headroom.
    try:
        vmem_cap = int(pltpu.get_tpu_info().vmem_capacity_bytes)
    except Exception:  # pragma: no cover - conservative fallback (v7x size)
        vmem_cap = 64 * 1024 * 1024
    weight_bytes = (w1.size * w1.dtype.itemsize + w2.size * w2.dtype.itemsize
                    + (gamma2.size + beta2.size + b1_2.size + b2_2.size) * 4)
    stream_bytes = 2 * 2 * tm * D * x.dtype.itemsize      # x + out, 2 bufs each
    interm_bytes = tm * (H + D) * 4                        # f32 temporaries
    needed = weight_bytes + stream_bytes + interm_bytes
    vmem_limit = int(min(max(2 * needed, 32 * 1024 * 1024),
                         vmem_cap - 8 * 1024 * 1024))

    bytes_accessed = int(
        x2d.size * x2d.dtype.itemsize
        + weight_bytes
        + M * D * x.dtype.itemsize)
    cost = pl.CostEstimate(
        flops=int(4 * M * D * H),            # two matmuls: 2*M*D*H each
        transcendentals=int(M * H),          # tanh per hidden activation
        bytes_accessed=bytes_accessed)

    inv_spec = lambda shape: pl.BlockSpec(   # grid-invariant, single-buffered
        shape, lambda i: (0, 0), pipeline_mode=pl.Buffered(1))

    out2d = pl.pallas_call(
        _ffn_kernel,
        out_shape=jax.ShapeDtypeStruct((M, D), x.dtype),
        grid_spec=pltpu.PrefetchScalarGridSpec(
            num_scalar_prefetch=0,
            grid=grid,
            in_specs=[
                pl.BlockSpec((tm, D), lambda i: (i, 0)),   # x row tile
                inv_spec((1, D)),                          # ln gamma
                inv_spec((1, D)),                          # ln beta
                inv_spec((D, H)),                          # w1
                inv_spec((1, H)),                          # b1
                inv_spec((H, D)),                          # w2
                inv_spec((1, D)),                          # b2
            ],
            out_specs=pl.BlockSpec((tm, D), lambda i: (i, 0)),
        ),
        compiler_params=pltpu.CompilerParams(
            dimension_semantics=("parallel",),
            vmem_limit_bytes=vmem_limit),
        cost_estimate=cost,
    )(x2d, gamma2, beta2, w1, b1_2, w2, b2_2)

    return out2d.reshape(B, S, D)


def init_params(key, dim, hidden_dim, weight_dtype=jnp.bfloat16):
    """Deterministic synthetic parameters (shapes match the torch module)."""
    k1, k2, k3, k4 = jax.random.split(key, 4)
    # Linear weights stored as (in, out): equivalent to torch weight.T.
    # bf16 weight storage: native MXU dtype, halves weight HBM traffic / VMEM.
    w1 = (jax.random.normal(k1, (dim, hidden_dim), jnp.float32)
          * (1.0 / jnp.sqrt(dim))).astype(weight_dtype)
    b1 = jax.random.normal(k2, (hidden_dim,), jnp.float32) * 0.01
    w2 = (jax.random.normal(k3, (hidden_dim, dim), jnp.float32)
          * (1.0 / jnp.sqrt(hidden_dim))).astype(weight_dtype)
    b2 = jax.random.normal(k4, (dim,), jnp.float32) * 0.01
    return {
        "ln_gamma": jnp.ones((dim,), jnp.float32),
        "ln_beta": jnp.zeros((dim,), jnp.float32),
        "w1": w1, "b1": b1, "w2": w2, "b2": b2,
    }


def _reference(x, p):
    # f32 reference with the same (bf16) weights; erf GELU like torch default.
    mean = jnp.mean(x, axis=-1, keepdims=True)
    var = jnp.mean((x - mean) ** 2, axis=-1, keepdims=True)
    xn = (x - mean) * jax.lax.rsqrt(var + LN_EPS)
    xn = xn * p["ln_gamma"] + p["ln_beta"]
    h = jax.nn.gelu(xn @ p["w1"].astype(jnp.float32) + p["b1"],
                    approximate=False)
    return h @ p["w2"].astype(jnp.float32) + p["b2"]


if __name__ == "__main__":
    key = jax.random.PRNGKey(0)
    kx, kp = jax.random.split(key)

    # Small but lane-dense demo shapes; seq chosen so batch*seq is NOT a
    # multiple of the row tile, exercising the masked edge-block path, and the
    # row grid has 2 steps (megacore sharding path).
    batch, seq, dim, hidden_dim = 2, 13, 128, 256
    x = jax.random.normal(kx, (batch, seq, dim), jnp.float32)
    params = init_params(kp, dim, hidden_dim)

    out = feed_forward(x, params)
    out = jax.block_until_ready(out)

    ref = _reference(x, params)
    assert out.shape == x.shape and out.dtype == x.dtype
    # Tolerance covers bf16 activation casts + tanh-GELU vs erf-GELU.
    assert jnp.allclose(out, ref, atol=3e-2, rtol=3e-2), "mismatch vs reference"
    print("KERNEL_OK")
</pallas_src>

<mosaic_0001>
module attributes {stable_mosaic.version = 11 : i64} {
  func.func @_ffn_kernel(%arg0: i32, %arg1: memref<16x128xf32, #tpu.memory_space<vmem>>, %arg2: memref<1x128xf32, #tpu.memory_space<vmem>>, %arg3: memref<1x128xf32, #tpu.memory_space<vmem>>, %arg4: memref<128x256xbf16, #tpu.memory_space<vmem>>, %arg5: memref<1x256xf32, #tpu.memory_space<vmem>>, %arg6: memref<256x128xbf16, #tpu.memory_space<vmem>>, %arg7: memref<1x128xf32, #tpu.memory_space<vmem>>, %arg8: memref<16x128xf32, #tpu.memory_space<vmem>>) attributes {dimension_semantics = [#tpu.dimension_semantics<parallel>], iteration_bounds = array<i64: 2>, scalar_prefetch = 0 : i64, scratch_operands = 0 : i64, tpu.core_type = #tpu.core_type<tc>, window_params = [{transform_indices = @transform_0, window_bounds = array<i64: 16, 128>}, {pipeline_mode = #tpu.pipeline_mode<synchronous>, transform_indices = @transform_1, window_bounds = array<i64: 1, 128>}, {pipeline_mode = #tpu.pipeline_mode<synchronous>, transform_indices = @transform_2, window_bounds = array<i64: 1, 128>}, {pipeline_mode = #tpu.pipeline_mode<synchronous>, transform_indices = @transform_3, window_bounds = array<i64: 128, 256>}, {pipeline_mode = #tpu.pipeline_mode<synchronous>, transform_indices = @transform_4, window_bounds = array<i64: 1, 256>}, {pipeline_mode = #tpu.pipeline_mode<synchronous>, transform_indices = @transform_5, window_bounds = array<i64: 256, 128>}, {pipeline_mode = #tpu.pipeline_mode<synchronous>, transform_indices = @transform_6, window_bounds = array<i64: 1, 128>}, {transform_indices = @transform_7, window_bounds = array<i64: 16, 128>}]} {
    %c0 = arith.constant 0 : index
    %c0_0 = arith.constant 0 : index
    %0 = vector.load %arg1[%c0, %c0_0] : memref<16x128xf32, #tpu.memory_space<vmem>>, vector<16x128xf32>
    %cst = arith.constant dense<0.000000e+00> : vector<16xf32>
    %1 = vector.multi_reduction <add>, %0, %cst [1] : vector<16x128xf32> to vector<16xf32>
    %2 = vector.shape_cast %1 : vector<16xf32> to vector<16x1xf32>
    %cst_1 = arith.constant 1.280000e+02 : f32
    %3 = vector.broadcast %cst_1 : f32 to vector<16x1xf32>
    %4 = arith.divf %2, %3 : vector<16x1xf32>
    %5 = arith.mulf %0, %0 : vector<16x128xf32>
    %cst_2 = arith.constant dense<0.000000e+00> : vector<16xf32>
    %6 = vector.multi_reduction <add>, %5, %cst_2 [1] : vector<16x128xf32> to vector<16xf32>
    %7 = vector.shape_cast %6 : vector<16xf32> to vector<16x1xf32>
    %cst_3 = arith.constant 1.280000e+02 : f32
    %8 = vector.broadcast %cst_3 : f32 to vector<16x1xf32>
    %9 = arith.divf %7, %8 : vector<16x1xf32>
    %10 = arith.mulf %4, %4 : vector<16x1xf32>
    %11 = arith.subf %9, %10 : vector<16x1xf32>
    %cst_4 = arith.constant 9.99999974E-6 : f32
    %12 = vector.broadcast %cst_4 : f32 to vector<16x1xf32>
    %13 = arith.addf %11, %12 : vector<16x1xf32>
    %14 = math.rsqrt %13 : vector<16x1xf32>
    %15 = vector.broadcast %4 : vector<16x1xf32> to vector<16x128xf32>
    %16 = arith.subf %0, %15 : vector<16x128xf32>
    %17 = vector.broadcast %14 : vector<16x1xf32> to vector<16x128xf32>
    %18 = arith.mulf %16, %17 : vector<16x128xf32>
    %c0_5 = arith.constant 0 : index
    %c0_6 = arith.constant 0 : index
    %19 = vector.load %arg2[%c0_5, %c0_6] : memref<1x128xf32, #tpu.memory_space<vmem>>, vector<1x128xf32>
    %20 = vector.broadcast %19 : vector<1x128xf32> to vector<16x128xf32>
    %21 = arith.mulf %18, %20 : vector<16x128xf32>
    %c0_7 = arith.constant 0 : index
    %c0_8 = arith.constant 0 : index
    %22 = vector.load %arg3[%c0_7, %c0_8] : memref<1x128xf32, #tpu.memory_space<vmem>>, vector<1x128xf32>
    %23 = vector.broadcast %22 : vector<1x128xf32> to vector<16x128xf32>
    %24 = arith.addf %21, %23 : vector<16x128xf32>
    %25 = arith.truncf %24 : vector<16x128xf32> to vector<16x128xbf16>
    %c0_9 = arith.constant 0 : index
    %c0_10 = arith.constant 0 : index
    %26 = vector.load %arg4[%c0_9, %c0_10] : memref<128x256xbf16, #tpu.memory_space<vmem>>, vector<128x256xbf16>
    %cst_11 = arith.constant dense<0.000000e+00> : vector<16x256xf32>
    %27 = tpu.matmul %25, %26, %cst_11 {dimension_numbers = #tpu.dot_dimension_numbers<[1], [0], [0], [1], [0, 0, 1, 1], [], []>} : vector<16x128xbf16>, vector<128x256xbf16>, vector<16x256xf32> -> vector<16x256xf32>
    %c0_12 = arith.constant 0 : index
    %c0_13 = arith.constant 0 : index
    %28 = vector.load %arg5[%c0_12, %c0_13] : memref<1x256xf32, #tpu.memory_space<vmem>>, vector<1x256xf32>
    %29 = vector.broadcast %28 : vector<1x256xf32> to vector<16x256xf32>
    %30 = arith.addf %27, %29 : vector<16x256xf32>
    %31 = arith.mulf %30, %30 : vector<16x256xf32>
    %32 = arith.mulf %30, %31 : vector<16x256xf32>
    %cst_14 = arith.constant 4.471500e-02 : f32
    %33 = vector.broadcast %cst_14 : f32 to vector<16x256xf32>
    %34 = arith.mulf %33, %32 : vector<16x256xf32>
    %35 = arith.addf %30, %34 : vector<16x256xf32>
    %cst_15 = arith.constant 0.797884583 : f32
    %36 = vector.broadcast %cst_15 : f32 to vector<16x256xf32>
    %37 = arith.mulf %36, %35 : vector<16x256xf32>
    %38 = math.tanh %37 : vector<16x256xf32>
    %cst_16 = arith.constant 1.000000e+00 : f32
    %39 = vector.broadcast %cst_16 : f32 to vector<16x256xf32>
    %40 = arith.addf %39, %38 : vector<16x256xf32>
    %cst_17 = arith.constant 5.000000e-01 : f32
    %41 = vector.broadcast %cst_17 : f32 to vector<16x256xf32>
    %42 = arith.mulf %41, %40 : vector<16x256xf32>
    %43 = arith.mulf %30, %42 : vector<16x256xf32>
    %44 = arith.truncf %43 : vector<16x256xf32> to vector<16x256xbf16>
    %c0_18 = arith.constant 0 : index
    %c0_19 = arith.constant 0 : index
    %45 = vector.load %arg6[%c0_18, %c0_19] : memref<256x128xbf16, #tpu.memory_space<vmem>>, vector<256x128xbf16>
    %cst_20 = arith.constant dense<0.000000e+00> : vector<16x128xf32>
    %46 = tpu.matmul %44, %45, %cst_20 {dimension_numbers = #tpu.dot_dimension_numbers<[1], [0], [0], [1], [0, 0, 1, 1], [], []>} : vector<16x256xbf16>, vector<256x128xbf16>, vector<16x128xf32> -> vector<16x128xf32>
    %c0_21 = arith.constant 0 : index
    %c0_22 = arith.constant 0 : index
    %47 = vector.load %arg7[%c0_21, %c0_22] : memref<1x128xf32, #tpu.memory_space<vmem>>, vector<1x128xf32>
    %48 = vector.broadcast %47 : vector<1x128xf32> to vector<16x128xf32>
    %49 = arith.addf %46, %48 : vector<16x128xf32>
    %c0_23 = arith.constant 0 : index
    %c0_24 = arith.constant 0 : index
    %50 = vector.load %arg8[%c0_23, %c0_24] : memref<16x128xf32, #tpu.memory_space<vmem>>, vector<16x128xf32>
    tpu.vector_store %arg8[%c0_23, %c0_24], %49 {strides = array<i32>} : memref<16x128xf32, #tpu.memory_space<vmem>>, vector<16x128xf32>,
    return
  }
  func.func @transform_0(%arg0: i32) -> (i32, i32) {
    %c0_i32 = arith.constant 0 : i32
    %c0_i32_0 = arith.constant 0 : i32
    return %arg0, %c0_i32 : i32, i32
  }
  func.func @transform_1(%arg0: i32) -> (i32, i32) {
    %c0_i32 = arith.constant 0 : i32
    %c0_i32_0 = arith.constant 0 : i32
    %c0_i32_1 = arith.constant 0 : i32
    return %c0_i32, %c0_i32_0 : i32, i32
  }
  func.func @transform_2(%arg0: i32) -> (i32, i32) {
    %c0_i32 = arith.constant 0 : i32
    %c0_i32_0 = arith.constant 0 : i32
    %c0_i32_1 = arith.constant 0 : i32
    return %c0_i32, %c0_i32_0 : i32, i32
  }
  func.func @transform_3(%arg0: i32) -> (i32, i32) {
    %c0_i32 = arith.constant 0 : i32
    %c0_i32_0 = arith.constant 0 : i32
    %c0_i32_1 = arith.constant 0 : i32
    return %c0_i32, %c0_i32_0 : i32, i32
  }
  func.func @transform_4(%arg0: i32) -> (i32, i32) {
    %c0_i32 = arith.constant 0 : i32
    %c0_i32_0 = arith.constant 0 : i32
    %c0_i32_1 = arith.constant 0 : i32
    return %c0_i32, %c0_i32_0 : i32, i32
  }
  func.func @transform_5(%arg0: i32) -> (i32, i32) {
    %c0_i32 = arith.constant 0 : i32
    %c0_i32_0 = arith.constant 0 : i32
    %c0_i32_1 = arith.constant 0 : i32
    return %c0_i32, %c0_i32_0 : i32, i32
  }
  func.func @transform_6(%arg0: i32) -> (i32, i32) {
    %c0_i32 = arith.constant 0 : i32
    %c0_i32_0 = arith.constant 0 : i32
    %c0_i32_1 = arith.constant 0 : i32
    return %c0_i32, %c0_i32_0 : i32, i32
  }
  func.func @transform_7(%arg0: i32) -> (i32, i32) {
    %c0_i32 = arith.constant 0 : i32
    %c0_i32_0 = arith.constant 0 : i32
    return %arg0, %c0_i32 : i32, i32
  }
}

</mosaic_0001>

<llo_original>
// kernel: feed_forward.1
$region0: #{feed_forward.1}
  #allocation0 [shape = 'u32[]', space=smem, size = 0x4, offset = 0x4, fixed_abs, tag = 'smem constant byte address 0x4 - core index']
  #allocation1 [shape = 'u32[144,128]{1,0:T(1,128)}', space=vmem, size = 0x12000, scoped, tag = 'internal scratch']
  %s0 = inlined_call_operand.vmem [shape: f32[26,128], index: 0, kind: input, shape index: {}]
  %s1 = inlined_call_operand.vmem [shape: f32[1,128], index: 1, kind: input, shape index: {}]
  %s2 = inlined_call_operand.vmem [shape: f32[1,128], index: 2, kind: input, shape index: {}]
  %s3 = inlined_call_operand.vmem [shape: bf16[128,256], index: 3, kind: input, shape index: {}]
  %s4 = inlined_call_operand.vmem [shape: f32[1,256], index: 4, kind: input, shape index: {}]
  %s5 = inlined_call_operand.hbm [shape: bf16[256,128], index: 5, kind: input, shape index: {}]
  %s6 = inlined_call_operand.vmem [shape: f32[1,128], index: 6, kind: input, shape index: {}]
  %s7 = inlined_call_operand.vmem [shape: f32[26,128], index: 7, kind: output, shape index: {}]
  %s8 = sld [smem:[#allocation0]]
  $region65: #{feed_forward.1} parent=0
    _
  %s10 = ssub.s32 1, %s8
  %s11 = scalar_select 0, %s10, %s8
  $region1: #{feed_forward.1} parent=0
    #allocation2 [shape = 'u8[65536]{0}', space=vmem, size = 0x10000, scoped, tag = 'input window, operand 5, single buffered']
    #allocation3 [shape = 's32[2]{0}', space=sflag, size = 0x8, scoped, tag = 'scoped memory for feed_forward.1']
    %12 = vsyncpa [#allocation3], 0
    loop: start=0, step=1, limit=4
    $region2: #{feed_forward.1} parent=1 // loop_pre_header
      _
    $region3: #{feed_forward.1} parent=1 // loop_header
      %s14 = sphi 0, %s18
      %p15 = scmp.ge.s32.totalorder %s14, 4
      %s24 = sphi 0, %s26
      %s27 = sphi 0, %s24
      %s28 = sphi 0, %s27
      %s44 = sphi 0, %s28
      %s48 = sphi 0, %s48
      %s50 = sphi 0, %s48
      %s51 = sphi 0, %s50
      %s65 = sphi 0, %s51
      %s69 = sphi 0, %s69
      %s71 = sphi 0, %s69
      %s72 = sphi 0, %s71
      %s86 = sphi 0, %s72
      %s90 = sphi 0, %s90
      %s92 = sphi 0, %s90
      %s93 = sphi 0, %s92
      %s107 = sphi 0, %s93
      %s111 = sphi 0, %s111
      %s113 = sphi 0, %s111
      %s114 = sphi 0, %s113
      %s128 = sphi 0, %s114
      %s132 = sphi 0, %s132
      %s134 = sphi 0, %s132
      %s135 = sphi 0, %s134
      %s149 = sphi 0, %s135
      %s153 = sphi 0, %s153
      %s155 = sphi 0, %s153
      %s156 = sphi 0, %s155
      %s170 = sphi 0, %s156
      %s176 = sphi 0, %s178
      %s179 = sphi 0, %s176
      %s180 = sphi 0, %s179
      %s196 = sphi 0, %s180
    $region4: #{feed_forward.1} parent=1 // loop_header_branch
      %17 = sbr.rel (%p15) target = $region8
    $region5: #{feed_forward.1} parent=1 // loop_body
      %s19 = ssub.s32 %s14, 1
      %s20 = ssub.s32 %s14, 2
      %s21 = sadd.s32 %s14, 1
      %s22 = ssub.s32 %s14, %s21
      %p23 = scmp.eq.s32.totalorder %s22, 0
      %s25 = sadd.s32 %s24, 1
      %s26 = scalar_select %p23, %s24, %s25
      %p29 = pneg %p23
      %p30 = scmp.eq.s32.totalorder %s14, 1
      %p31 = por %p29, %p30
      %p32 = scmp.ne.s32.totalorder %s24, %s27
      %p33 = scmp.eq.s32.totalorder %s14, 0
      %p34 = por %p32, %p33
      %p35 = scmp.ne.s32.totalorder %s24, %s27
      %p36 = scmp.eq.s32.totalorder %s19, 1
      %p37 = por %p35, %p36
      %p38 = scmp.ne.s32.totalorder %s27, %s28
      %p39 = scmp.eq.s32.totalorder %s19, 0
      %p40 = por %p38, %p39
      %p41 = scmp.ne.s32.totalorder %s27, %s28
      %p42 = scmp.eq.s32.totalorder %s20, 1
      %p43 = por %p41, %p42
      %p45 = scmp.ne.s32.totalorder %s28, %s44
      %p46 = scmp.eq.s32.totalorder %s20, 0
      %p47 = por %p45, %p46
      %s49 = sadd.s32 %s48, 1
      %p52 = scmp.eq.s32.totalorder %s14, 1
      %p53 = scmp.ne.s32.totalorder %s48, %s50
      %p54 = scmp.eq.s32.totalorder %s14, 0
      %p55 = por %p53, %p54
      %p56 = scmp.ne.s32.totalorder %s48, %s50
      %p57 = scmp.eq.s32.totalorder %s19, 1
      %p58 = por %p56, %p57
      %p59 = scmp.ne.s32.totalorder %s50, %s51
      %p60 = scmp.eq.s32.totalorder %s19, 0
      %p61 = por %p59, %p60
      %p62 = scmp.ne.s32.totalorder %s50, %s51
      %p63 = scmp.eq.s32.totalorder %s20, 1
      %p64 = por %p62, %p63
      %p66 = scmp.ne.s32.totalorder %s51, %s65
      %p67 = scmp.eq.s32.totalorder %s20, 0
      %p68 = por %p66, %p67
      %s70 = sadd.s32 %s69, 1
      %p73 = scmp.eq.s32.totalorder %s14, 1
      %p74 = scmp.ne.s32.totalorder %s69, %s71
      %p75 = scmp.eq.s32.totalorder %s14, 0
      %p76 = por %p74, %p75
      %p77 = scmp.ne.s32.totalorder %s69, %s71
      %p78 = scmp.eq.s32.totalorder %s19, 1
      %p79 = por %p77, %p78
      %p80 = scmp.ne.s32.totalorder %s71, %s72
      %p81 = scmp.eq.s32.totalorder %s19, 0
      %p82 = por %p80, %p81
      %p83 = scmp.ne.s32.totalorder %s71, %s72
      %p84 = scmp.eq.s32.totalorder %s20, 1
      %p85 = por %p83, %p84
      %p87 = scmp.ne.s32.totalorder %s72, %s86
      %p88 = scmp.eq.s32.totalorder %s20, 0
      %p89 = por %p87, %p88
      %s91 = sadd.s32 %s90, 1
      %p94 = scmp.eq.s32.totalorder %s14, 1
      %p95 = scmp.ne.s32.totalorder %s90, %s92
      %p96 = scmp.eq.s32.totalorder %s14, 0
      %p97 = por %p95, %p96
      %p98 = scmp.ne.s32.totalorder %s90, %s92
      %p99 = scmp.eq.s32.totalorder %s19, 1
      %p100 = por %p98, %p99
      %p101 = scmp.ne.s32.totalorder %s92, %s93
      %p102 = scmp.eq.s32.totalorder %s19, 0
      %p103 = por %p101, %p102
      %p104 = scmp.ne.s32.totalorder %s92, %s93
      %p105 = scmp.eq.s32.totalorder %s20, 1
      %p106 = por %p104, %p105
      %p108 = scmp.ne.s32.totalorder %s93, %s107
      %p109 = scmp.eq.s32.totalorder %s20, 0
      %p110 = por %p108, %p109
      %s112 = sadd.s32 %s111, 1
      %p115 = scmp.eq.s32.totalorder %s14, 1
      %p116 = scmp.ne.s32.totalorder %s111, %s113
      %p117 = scmp.eq.s32.totalorder %s14, 0
      %p118 = por %p116, %p117
      %p119 = scmp.ne.s32.totalorder %s111, %s113
      %p120 = scmp.eq.s32.totalorder %s19, 1
      %p121 = por %p119, %p120
      %p122 = scmp.ne.s32.totalorder %s113, %s114
      %p123 = scmp.eq.s32.totalorder %s19, 0
      %p124 = por %p122, %p123
      %p125 = scmp.ne.s32.totalorder %s113, %s114
      %p126 = scmp.eq.s32.totalorder %s20, 1
      %p127 = por %p125, %p126
      %p129 = scmp.ne.s32.totalorder %s114, %s128
      %p130 = scmp.eq.s32.totalorder %s20, 0
      %p131 = por %p129, %p130
      %s133 = sadd.s32 %s132, 1
      %p136 = scmp.eq.s32.totalorder %s14, 1
      %p137 = scmp.ne.s32.totalorder %s132, %s134
      %p138 = scmp.eq.s32.totalorder %s14, 0
      %p139 = por %p137, %p138
      %p140 = scmp.ne.s32.totalorder %s132, %s134
      %p141 = scmp.eq.s32.totalorder %s19, 1
      %p142 = por %p140, %p141
      %p143 = scmp.ne.s32.totalorder %s134, %s135
      %p144 = scmp.eq.s32.totalorder %s19, 0
      %p145 = por %p143, %p144
      %p146 = scmp.ne.s32.totalorder %s134, %s135
      %p147 = scmp.eq.s32.totalorder %s20, 1
      %p148 = por %p146, %p147
      %p150 = scmp.ne.s32.totalorder %s135, %s149
      %p151 = scmp.eq.s32.totalorder %s20, 0
      %p152 = por %p150, %p151
      %s154 = sadd.s32 %s153, 1
      %p157 = scmp.eq.s32.totalorder %s14, 1
      %p158 = scmp.ne.s32.totalorder %s153, %s155
      %p159 = scmp.eq.s32.totalorder %s14, 0
      %p160 = por %p158, %p159
      %p161 = scmp.ne.s32.totalorder %s153, %s155
      %p162 = scmp.eq.s32.totalorder %s19, 1
      %p163 = por %p161, %p162
      %p164 = scmp.ne.s32.totalorder %s155, %s156
      %p165 = scmp.eq.s32.totalorder %s19, 0
      %p166 = por %p164, %p165
      %p167 = scmp.ne.s32.totalorder %s155, %s156
      %p168 = scmp.eq.s32.totalorder %s20, 1
      %p169 = por %p167, %p168
      %p171 = scmp.ne.s32.totalorder %s156, %s170
      %p172 = scmp.eq.s32.totalorder %s20, 0
      %p173 = por %p171, %p172
      %s174 = ssub.s32 %s14, %s21
      %p175 = scmp.eq.s32.totalorder %s174, 0
      %s177 = sadd.s32 %s176, 1
      %s178 = scalar_select %p175, %s176, %s177
      %p181 = pneg %p175
      %p182 = scmp.eq.s32.totalorder %s14, 1
      %p183 = por %p181, %p182
      %p184 = scmp.ne.s32.totalorder %s176, %s179
      %p185 = scmp.eq.s32.totalorder %s14, 0
      %p186 = por %p184, %p185
      %p187 = scmp.ne.s32.totalorder %s176, %s179
      %p188 = scmp.eq.s32.totalorder %s19, 1
      %p189 = por %p187, %p188
      %p190 = scmp.ne.s32.totalorder %s179, %s180
      %p191 = scmp.eq.s32.totalorder %s19, 0
      %p192 = por %p190, %p191
      %p193 = scmp.ne.s32.totalorder %s179, %s180
      %p194 = scmp.eq.s32.totalorder %s20, 1
      %p195 = por %p193, %p194
      %p197 = scmp.ne.s32.totalorder %s180, %s196
      %p198 = scmp.eq.s32.totalorder %s20, 0
      %p199 = por %p197, %p198
      %p200 = scmp.le.s32.totalorder 1, %s14
      %p201 = scmp.lt.s32.totalorder %s14, 3
      %p202 = pnand %p200, %p201
      %p203 = pneg %p202
      // Predicated region
      $region9: #{feed_forward.1} parent=5 // pred_check
        _
      $region10: #{feed_forward.1} parent=5 // pred_check_branch
        %205 = sbr.rel (%p202) target = $region12
      $region11: #{feed_forward.1} parent=5 // pred_region
        %s206 = ssub.s32 %s14, 1
        // Predicated region
        $region13: #{feed_forward.1} parent=11 // pred_check
          %p207 = pneg %p61
        $region14: #{feed_forward.1} parent=11 // pred_check_branch
          %209 = sbr.rel (%p207) target = $region16
        $region15: #{feed_forward.1} parent=11 // pred_region
          _
        $region16: #{feed_forward.1} parent=11 // pred_fallthru
          _
        // Predicated region
        $region17: #{feed_forward.1} parent=11 // pred_check
          %p210 = pneg %p82
        $region18: #{feed_forward.1} parent=11 // pred_check_branch
          %212 = sbr.rel (%p210) target = $region20
        $region19: #{feed_forward.1} parent=11 // pred_region
          _
        $region20: #{feed_forward.1} parent=11 // pred_fallthru
          _
        // Predicated region
        $region21: #{feed_forward.1} parent=11 // pred_check
          %p213 = pneg %p103
        $region22: #{feed_forward.1} parent=11 // pred_check_branch
          %215 = sbr.rel (%p213) target = $region24
        $region23: #{feed_forward.1} parent=11 // pred_region
          _
        $region24: #{feed_forward.1} parent=11 // pred_fallthru
          _
        // Predicated region
        $region25: #{feed_forward.1} parent=11 // pred_check
          %p216 = pneg %p124
        $region26: #{feed_forward.1} parent=11 // pred_check_branch
          %218 = sbr.rel (%p216) target = $region28
        $region27: #{feed_forward.1} parent=11 // pred_region
          _
        $region28: #{feed_forward.1} parent=11 // pred_fallthru
          _
        // Predicated region
        $region29: #{feed_forward.1} parent=11 // pred_check
          %p219 = pneg %p145
        $region30: #{feed_forward.1} parent=11 // pred_check_branch
          %221 = sbr.rel (%p219) target = $region32
        $region31: #{feed_forward.1} parent=11 // pred_region
          %s223 = ssub.s32 2048, 2048
          %224 = vsyncadd [#allocation3], %s223
          %s225 = sshll.u32 [#allocation2], 4
          %s226 = int_to_ptr.vmem [resolvable:$true] %s225
          %231 = dma.hbm_to_vmem [thread:$0]  %s5, 2048, %s226, [#allocation3], 64, 64, 4
        $region32: #{feed_forward.1} parent=11 // pred_fallthru
          _
        // Predicated region
        $region33: #{feed_forward.1} parent=11 // pred_check
          %p232 = pneg %p166
        $region34: #{feed_forward.1} parent=11 // pred_check_branch
          %234 = sbr.rel (%p232) target = $region36
        $region35: #{feed_forward.1} parent=11 // pred_region
          _
        $region36: #{feed_forward.1} parent=11 // pred_fallthru
          _
      $region12: #{feed_forward.1} parent=5 // pred_fallthru
        _
      %p235 = scmp.lt.s32.totalorder %s14, 2
      // Predicated region
      $region37: #{feed_forward.1} parent=5 // pred_check
        %p236 = pneg %p235
      $region38: #{feed_forward.1} parent=5 // pred_check_branch
        %238 = sbr.rel (%p236) target = $region40
      $region39: #{feed_forward.1} parent=5 // pred_region
        // Predicated region
        $region41: #{feed_forward.1} parent=39 // pred_check
          %p239 = pneg %p34
        $region42: #{feed_forward.1} parent=39 // pred_check_branch
          %241 = sbr.rel (%p239) target = $region44
        $region43: #{feed_forward.1} parent=39 // pred_region
          %s242 = smul.u32 2, %s14
          %p243 = scmp.lt.s32.totalorder %s242, 3
          %s244 = scalar_select %p243, %s242, 3
          %s245 = smul.addr %s244, 8
          %s246 = scalar_lea.vmem %s0, %s245
          %s247 = smul.u32 2, %s14
        $region44: #{feed_forward.1} parent=39 // pred_fallthru
          _
      $region40: #{feed_forward.1} parent=5 // pred_fallthru
        _
      %p248 = scmp.le.s32.totalorder 1, %s14
      %p249 = scmp.lt.s32.totalorder %s14, 3
      %p250 = pnand %p248, %p249
      %p251 = pneg %p250
      // Predicated region
      $region45: #{feed_forward.1} parent=5 // pred_check
        _
      $region46: #{feed_forward.1} parent=5 // pred_check_branch
        %253 = sbr.rel (%p250) target = $region48
      $region47: #{feed_forward.1} parent=5 // pred_region
        %s254 = ssub.s32 %s14, 1
        // Predicated region
        $region49: #{feed_forward.1} parent=47 // pred_check
          %p255 = pneg %p145
        $region50: #{feed_forward.1} parent=47 // pred_check_branch
          %257 = sbr.rel (%p255) target = $region52
        $region51: #{feed_forward.1} parent=47 // pred_region
          %258 = dma.done [#allocation3], 2048
        $region52: #{feed_forward.1} parent=47 // pred_fallthru
          _
        %s259 = smul.u32 2, %s19
        %p260 = scmp.lt.s32.totalorder %s259, 3
        %s261 = scalar_select %p260, %s259, 3
        %s262 = smul.addr %s261, 8
        %s263 = scalar_lea.vmem %s0, %s262
        %p264 = pneg %p40
        %p265 = pneg %p37
        %p266 = pneg %p61
        %p267 = pneg %p58
        %p268 = pneg %p82
        %p269 = pneg %p79
        %p270 = pneg %p103
        %p271 = pneg %p100
        %p272 = pneg %p124
        %p273 = pneg %p121
        %p274 = pneg %p145
        %p275 = pneg %p142
        %p276 = pneg %p166
        %p277 = pneg %p163
        %p278 = pneg %p192
        %p279 = pneg %p189
        %s280 = smul.u32 2, %s19
        %p281 = scmp.lt.s32.totalorder %s280, 3
        %s282 = scalar_select %p281, %s280, 3
        %s283 = smul.addr %s282, 8
        %s284 = scalar_lea.vmem %s7, %s283
        %s285 = smul.u32 2, %s19
        %p286 = scmp.lt.s32.totalorder %s285, 3
        %s287 = scalar_select %p286, %s285, 3
        %s288 = smul.addr %s287, 8
        %s289 = scalar_lea.vmem %s0, %s288
        %s290 = smul.u32 2, %s19
        %s291 = smul.u32 2, %s19
        %p292 = scmp.lt.s32.totalorder %s291, 3
        %s293 = scalar_select %p292, %s291, 3
        %s294 = smul.addr %s293, 8
        %s295 = scalar_lea.vmem %s7, %s294
        %s296 = smul.u32 2, %s19
        %v298 = vld [vmem:[%s289] sm:$0xff]
        %v299 = vld [vmem:[%s289 + $0x8] sm:$0xff]
        %300 = vadd.xlane.f32.xlu0 %v298
        %v301 = vpop.xlane.xlu0 %300
        %302 = vadd.xlane.f32.xlu0 %v299
        %v303 = vpop.xlane.xlu0 %302
        %v304 = vrcp.pop 128.0
        %v305 = vmul.f32 %v301, %v304
        %v306 = vmul.f32 %v303, %v304
        %v307 = vmul.f32 %v298, %v298
        %v308 = vmul.f32 %v299, %v299
        %309 = vadd.xlane.f32.xlu0 %v307
        %v310 = vpop.xlane.xlu0 %309
        %311 = vadd.xlane.f32.xlu0 %v308
        %v312 = vpop.xlane.xlu0 %311
        %v313 = vmul.f32 %v310, %v304
        %v314 = vmul.f32 %v312, %v304
        %v315 = vmul.f32 %v305, %v305
        %v316 = vmul.f32 %v306, %v306
        %v317 = vsub.f32 %v313, %v315
        %v318 = vsub.f32 %v314, %v316
        %v319 = vadd.f32 %v317, 1e-05
        %v320 = vadd.f32 %v318, 1e-05
        %v321 = vrsqrt.pop %v319
        %v322 = vrsqrt.pop %v320
        %v323 = vsub.f32 %v298, %v305
        %v324 = vsub.f32 %v299, %v306
        %v325 = vmul.f32 %v323, %v321
        %v326 = vmul.f32 %v324, %v322
        %v327 = vld [vmem:[%s1] sm:$0x1]
        %v329 = vlaneseq
        %v330 = vshrl.u32 %v329, 7
        %v331 = vsub.s32 0, %v330
        %v332 = vrot.slane %v327, %v331
        %v334 = vmul.f32 %v325, %v332
        %v335 = vmul.f32 %v326, %v332
        %v336 = vld [vmem:[%s2] sm:$0x1]
        %v338 = vlaneseq
        %v339 = vshrl.u32 %v338, 7
        %v340 = vsub.s32 0, %v339
        %v341 = vrot.slane %v336, %v340
        %v343 = vadd.f32 %v334, %v341
        %v344 = vadd.f32 %v335, %v341
        %v345 = vpack.c.bf16 %v344, %v343
        %v346 = vld [vmem:[%s3] sm:$0xff]
        %v347 = vld [vmem:[%s3 + $0x8] sm:$0xff]
        %v348 = vld [vmem:[%s3 + $0x10] sm:$0xff]
        %v349 = vld [vmem:[%s3 + $0x18] sm:$0xff]
        %v350 = vld [vmem:[%s3 + $0x20] sm:$0xff]
        %v351 = vld [vmem:[%s3 + $0x28] sm:$0xff]
        %v352 = vld [vmem:[%s3 + $0x30] sm:$0xff]
        %v353 = vld [vmem:[%s3 + $0x38] sm:$0xff]
        %v354 = vld [vmem:[%s3 + $0x40] sm:$0xff]
        %v355 = vld [vmem:[%s3 + $0x48] sm:$0xff]
        %v356 = vld [vmem:[%s3 + $0x50] sm:$0xff]
        %v357 = vld [vmem:[%s3 + $0x58] sm:$0xff]
        %v358 = vld [vmem:[%s3 + $0x60] sm:$0xff]
        %v359 = vld [vmem:[%s3 + $0x68] sm:$0xff]
        %v360 = vld [vmem:[%s3 + $0x70] sm:$0xff]
        %v361 = vld [vmem:[%s3 + $0x78] sm:$0xff]
        %v362 = vld [vmem:[%s4] sm:$0x3]
        %v364 = vlaneseq
        %v365 = vshrl.u32 %v364, 7
        %v366 = vsub.s32 0, %v365
        %v367 = vrot.slane %v362, %v366
        %v368 = vlaneseq
        %v369 = vshrl.u32 %v368, 7
        %v370 = vsub.s32 1, %v369
        %v371 = vrot.slane %v362, %v370
        %v390 = vunpack.c.l.b16 %v346
        %v391 = vunpack.c.h.b16 %v346
        %v392 = vunpack.c.l.b16 %v347
        %v393 = vunpack.c.h.b16 %v347
        %v394 = vunpack.c.l.b16 %v348
        %v395 = vunpack.c.h.b16 %v348
        %v396 = vunpack.c.l.b16 %v349
        %v397 = vunpack.c.h.b16 %v349
        %v398 = vunpack.c.l.b16 %v350
        %v399 = vunpack.c.h.b16 %v350
        %v400 = vunpack.c.l.b16 %v351
        %v401 = vunpack.c.h.b16 %v351
        %v402 = vunpack.c.l.b16 %v352
        %v403 = vunpack.c.h.b16 %v352
        %v404 = vunpack.c.l.b16 %v353
        %v405 = vunpack.c.h.b16 %v353
        %v406 = vunpack.c.l.b16 %v354
        %v407 = vunpack.c.h.b16 %v354
        %v408 = vunpack.c.l.b16 %v355
        %v409 = vunpack.c.h.b16 %v355
        %v410 = vunpack.c.l.b16 %v356
        %v411 = vunpack.c.h.b16 %v356
        %v412 = vunpack.c.l.b16 %v357
        %v413 = vunpack.c.h.b16 %v357
        %v414 = vunpack.c.l.b16 %v358
        %v415 = vunpack.c.h.b16 %v358
        %v416 = vunpack.c.l.b16 %v359
        %v417 = vunpack.c.h.b16 %v359
        %v418 = vunpack.c.l.b16 %v360
        %v419 = vunpack.c.h.b16 %v360
        %v420 = vunpack.c.l.b16 %v361
        %v421 = vunpack.c.h.b16 %v361
        %v422 = vpack.c.b16 %v392, %v390
        %v423 = vpack.c.b16 %v393, %v391
        %v424 = vpack.c.b16 %v396, %v394
        %v425 = vpack.c.b16 %v397, %v395
        %v426 = vpack.c.b16 %v400, %v398
        %v427 = vpack.c.b16 %v401, %v399
        %v428 = vpack.c.b16 %v404, %v402
        %v429 = vpack.c.b16 %v405, %v403
        %v430 = vpack.c.b16 %v408, %v406
        %v431 = vpack.c.b16 %v409, %v407
        %v432 = vpack.c.b16 %v412, %v410
        %v433 = vpack.c.b16 %v413, %v411
        %v434 = vpack.c.b16 %v416, %v414
        %v435 = vpack.c.b16 %v417, %v415
        %v436 = vpack.c.b16 %v420, %v418
        %v437 = vpack.c.b16 %v421, %v419
        %454 = vmatprep.subr.bf16.mxu0 %v437
        %455 = vmatpush1.bf16.msra.mxu0 %v436
        %456 = vmatprep.subr.bf16.mxu0 %v435
        %457 = vmatpush1.bf16.msra.mxu0 %v434
        %458 = vmatprep.subr.bf16.mxu0 %v433
        %459 = vmatpush1.bf16.msra.mxu0 %v432
        %460 = vmatprep.subr.bf16.mxu0 %v431
        %461 = vmatpush1.bf16.msra.mxu0 %v430
        %462 = vmatprep.subr.bf16.mxu0 %v429
        %463 = vmatpush1.bf16.msra.mxu0 %v428
        %464 = vmatprep.subr.bf16.mxu0 %v427
        %465 = vmatpush1.bf16.msra.mxu0 %v426
        %466 = vmatprep.subr.bf16.mxu0 %v425
        %467 = vmatpush1.bf16.msra.mxu0 %v424
        %468 = vmatprep.subr.bf16.mxu0 %v423
        %469 = vmatpush1.bf16.msra.mxu0 %v422
        %470 = vmatprep.subr.bf16.mxu0 0
        %471 = vmatpush2.bf16.msra.mxu0 0
        %472 = vmatprep.subr.bf16.mxu0 0
        %473 = vmatpush2.bf16.msra.mxu0 0
        %474 = vmatprep.subr.bf16.mxu0 0
        %475 = vmatpush2.bf16.msra.mxu0 0
        %476 = vmatprep.subr.bf16.mxu0 0
        %477 = vmatpush2.bf16.msra.mxu0 0
        %478 = vmatprep.subr.bf16.mxu0 0
        %479 = vmatpush2.bf16.msra.mxu0 0
        %480 = vmatprep.subr.bf16.mxu0 0
        %481 = vmatpush2.bf16.msra.mxu0 0
        %482 = vmatprep.subr.bf16.mxu0 0
        %483 = vmatpush2.bf16.msra.mxu0 0
        %484 = vmatprep.subr.bf16.mxu0 0
        %485 = vmatpush2.bf16.msra.mxu0 0
        %486 = vmatprep.mubr.bf16.mxu0 0
        %487 = vmatmul.mubr.bf16.gmra.mxu0 %v345
        %v488 = vpop.f32.mrf.mxu0
        %v489 = vadd.f32 %v367, %v488
        %v490 = vpop.f32.mrf.mxu0
        %v491 = vadd.f32 %v371, %v490
        %v492 = vpop.f32.mrf.mxu0
        %v493 = vadd.f32 %v367, %v492
        %v494 = vpop.f32.mrf.mxu0
        %v495 = vadd.f32 %v371, %v494
        %496 = vdwg.mxu0
        %v497 = vmul.f32 %v489, %v489
        %v498 = vmul.f32 %v491, %v491
        %v499 = vmul.f32 %v493, %v493
        %v500 = vmul.f32 %v495, %v495
        %v501 = vmul.f32 %v489, %v497
        %v502 = vmul.f32 %v491, %v498
        %v503 = vmul.f32 %v493, %v499
        %v504 = vmul.f32 %v495, %v500
        %v505 = vmul.f32 %v501, 0.044715
        %v506 = vmul.f32 %v502, 0.044715
        %v507 = vmul.f32 %v503, 0.044715
        %v508 = vmul.f32 %v504, 0.044715
        %v509 = vadd.f32 %v489, %v505
        %v510 = vadd.f32 %v491, %v506
        %v511 = vadd.f32 %v493, %v507
        %v512 = vadd.f32 %v495, %v508
        %v513 = vmul.f32 %v509, 0.7978846
        %v514 = vmul.f32 %v510, 0.7978846
        %v515 = vmul.f32 %v511, 0.7978846
        %v516 = vmul.f32 %v512, 0.7978846
        %v517 = vtanh.pop %v513
        %v518 = vtanh.pop %v514
        %v519 = vtanh.pop %v515
        %v520 = vtanh.pop %v516
        %v521 = vadd.f32 %v517, 1.0
        %v522 = vadd.f32 %v518, 1.0
        %v523 = vadd.f32 %v519, 1.0
        %v524 = vadd.f32 %v520, 1.0
        %v525 = vmul.f32 %v521, 0.5
        %v526 = vmul.f32 %v522, 0.5
        %v527 = vmul.f32 %v523, 0.5
        %v528 = vmul.f32 %v524, 0.5
        %v529 = vmul.f32 %v489, %v525
        %v530 = vmul.f32 %v491, %v526
        %v531 = vmul.f32 %v493, %v527
        %v532 = vmul.f32 %v495, %v528
        %v533 = vpack.c.bf16 %v531, %v529
        %v534 = vpack.c.bf16 %v532, %v530
        %v535 = vld [vmem:[#allocation2] sm:$0xf]
        %v536 = vld [vmem:[#allocation2 + $0x4] sm:$0xf]
        %v537 = vld [vmem:[#allocation2 + $0x8] sm:$0xf]
        %v538 = vld [vmem:[#allocation2 + $0xc] sm:$0xf]
        %v539 = vld [vmem:[#allocation2 + $0x10] sm:$0xf]
        %v540 = vld [vmem:[#allocation2 + $0x14] sm:$0xf]
        %v541 = vld [vmem:[#allocation2 + $0x18] sm:$0xf]
        %v542 = vld [vmem:[#allocation2 + $0x1c] sm:$0xf]
        %v543 = vld [vmem:[#allocation2 + $0x20] sm:$0xf]
        %v544 = vld [vmem:[#allocation2 + $0x24] sm:$0xf]
        %v545 = vld [vmem:[#allocation2 + $0x28] sm:$0xf]
        %v546 = vld [vmem:[#allocation2 + $0x2c] sm:$0xf]
        %v547 = vld [vmem:[#allocation2 + $0x30] sm:$0xf]
        %v548 = vld [vmem:[#allocation2 + $0x34] sm:$0xf]
        %v549 = vld [vmem:[#allocation2 + $0x38] sm:$0xf]
        %v550 = vld [vmem:[#allocation2 + $0x3c] sm:$0xf]
        %v551 = vld [vmem:[#allocation2 + $0x40] sm:$0xf]
        %v552 = vld [vmem:[#allocation2 + $0x44] sm:$0xf]
        %v553 = vld [vmem:[#allocation2 + $0x48] sm:$0xf]
        %v554 = vld [vmem:[#allocation2 + $0x4c] sm:$0xf]
        %v555 = vld [vmem:[#allocation2 + $0x50] sm:$0xf]
        %v556 = vld [vmem:[#allocation2 + $0x54] sm:$0xf]
        %v557 = vld [vmem:[#allocation2 + $0x58] sm:$0xf]
        %v558 = vld [vmem:[#allocation2 + $0x5c] sm:$0xf]
        %v559 = vld [vmem:[#allocation2 + $0x60] sm:$0xf]
        %v560 = vld [vmem:[#allocation2 + $0x64] sm:$0xf]
        %v561 = vld [vmem:[#allocation2 + $0x68] sm:$0xf]
        %v562 = vld [vmem:[#allocation2 + $0x6c] sm:$0xf]
        %v563 = vld [vmem:[#allocation2 + $0x70] sm:$0xf]
        %v564 = vld [vmem:[#allocation2 + $0x74] sm:$0xf]
        %v565 = vld [vmem:[#allocation2 + $0x78] sm:$0xf]
        %v566 = vld [vmem:[#allocation2 + $0x7c] sm:$0xf]
        %v567 = vld [vmem:[%s6] sm:$0x1]
        %v569 = vlaneseq
        %v570 = vshrl.u32 %v569, 7
        %v571 = vsub.s32 0, %v570
        %v572 = vrot.slane %v567, %v571
        %v606 = vunpack.c.l.b16 %v535
        %v607 = vunpack.c.l.b16 %v536
        %v608 = vunpack.c.l.b16 %v537
        %v609 = vunpack.c.l.b16 %v538
        %v610 = vunpack.c.l.b16 %v539
        %v611 = vunpack.c.l.b16 %v540
        %v612 = vunpack.c.l.b16 %v541
        %v613 = vunpack.c.l.b16 %v542
        %v614 = vunpack.c.l.b16 %v543
        %v615 = vunpack.c.l.b16 %v544
        %v616 = vunpack.c.l.b16 %v545
        %v617 = vunpack.c.l.b16 %v546
        %v618 = vunpack.c.l.b16 %v547
        %v619 = vunpack.c.l.b16 %v548
        %v620 = vunpack.c.l.b16 %v549
        %v621 = vunpack.c.l.b16 %v550
        %v622 = vunpack.c.l.b16 %v551
        %v623 = vunpack.c.l.b16 %v552
        %v624 = vunpack.c.l.b16 %v553
        %v625 = vunpack.c.l.b16 %v554
        %v626 = vunpack.c.l.b16 %v555
        %v627 = vunpack.c.l.b16 %v556
        %v628 = vunpack.c.l.b16 %v557
        %v629 = vunpack.c.l.b16 %v558
        %v630 = vunpack.c.l.b16 %v559
        %v631 = vunpack.c.l.b16 %v560
        %v632 = vunpack.c.l.b16 %v561
        %v633 = vunpack.c.l.b16 %v562
        %v634 = vunpack.c.l.b16 %v563
        %v635 = vunpack.c.l.b16 %v564
        %v636 = vunpack.c.l.b16 %v565
        %v637 = vunpack.c.l.b16 %v566
        %v638 = vpack.c.b16 %v607, %v606
        %v639 = vpack.c.b16 %v609, %v608
        %v640 = vpack.c.b16 %v611, %v610
        %v641 = vpack.c.b16 %v613, %v612
        %v642 = vpack.c.b16 %v615, %v614
        %v643 = vpack.c.b16 %v617, %v616
        %v644 = vpack.c.b16 %v619, %v618
        %v645 = vpack.c.b16 %v621, %v620
        %v646 = vpack.c.b16 %v623, %v622
        %v647 = vpack.c.b16 %v625, %v624
        %v648 = vpack.c.b16 %v627, %v626
        %v649 = vpack.c.b16 %v629, %v628
        %v650 = vpack.c.b16 %v631, %v630
        %v651 = vpack.c.b16 %v633, %v632
        %v652 = vpack.c.b16 %v635, %v634
        %v653 = vpack.c.b16 %v637, %v636
        %670 = vmatprep.subr.bf16.mxu0 0
        %671 = vmatpush1.bf16.msra.mxu0 %v645
        %672 = vmatprep.subr.bf16.mxu0 0
        %673 = vmatpush1.bf16.msra.mxu0 %v644
        %674 = vmatprep.subr.bf16.mxu0 0
        %675 = vmatpush1.bf16.msra.mxu0 %v643
        %676 = vmatprep.subr.bf16.mxu0 0
        %677 = vmatpush1.bf16.msra.mxu0 %v642
        %678 = vmatprep.subr.bf16.mxu0 0
        %679 = vmatpush1.bf16.msra.mxu0 %v641
        %680 = vmatprep.subr.bf16.mxu0 0
        %681 = vmatpush1.bf16.msra.mxu0 %v640
        %682 = vmatprep.subr.bf16.mxu0 0
        %683 = vmatpush1.bf16.msra.mxu0 %v639
        %684 = vmatprep.subr.bf16.mxu0 0
        %685 = vmatpush1.bf16.msra.mxu0 %v638
        %686 = vmatprep.subr.bf16.mxu0 0
        %687 = vmatpush2.bf16.msra.mxu0 %v653
        %688 = vmatprep.subr.bf16.mxu0 0
        %689 = vmatpush2.bf16.msra.mxu0 %v652
        %690 = vmatprep.subr.bf16.mxu0 0
        %691 = vmatpush2.bf16.msra.mxu0 %v651
        %692 = vmatprep.subr.bf16.mxu0 0
        %693 = vmatpush2.bf16.msra.mxu0 %v650
        %694 = vmatprep.subr.bf16.mxu0 0
        %695 = vmatpush2.bf16.msra.mxu0 %v649
        %696 = vmatprep.subr.bf16.mxu0 0
        %697 = vmatpush2.bf16.msra.mxu0 %v648
        %698 = vmatprep.subr.bf16.mxu0 0
        %699 = vmatpush2.bf16.msra.mxu0 %v647
        %700 = vmatprep.subr.bf16.mxu0 0
        %701 = vmatpush2.bf16.msra.mxu0 %v646
        %702 = vmatprep.mubr.bf16.mxu0 %v534
        %703 = vmatmul.mubr.bf16.gmra.mxu0 %v533
        %v704 = vpop.f32.mrf.mxu0
        %v705 = vadd.f32 %v572, %v704
        %v706 = vpop.f32.mrf.mxu0
        %v707 = vpop.f32.mrf.mxu0
        %v708 = vadd.f32 %v572, %v707
        %v709 = vpop.f32.mrf.mxu0
        %710 = vdwg.mxu0
        %711 = vst [vmem:[%s295] sm:$0xff] %v705
        %712 = vst [vmem:[%s295 + $0x8] sm:$0xff] %v708
        %s713 = smul.u32 2, %s19
        %p714 = scmp.lt.s32.totalorder %s713, 3
        %s715 = scalar_select %p714, %s713, 3
        %s716 = smul.addr %s715, 8
        %s717 = scalar_lea.vmem %s7, %s716
        // Predicated region
        $region53: #{feed_forward.1} parent=47 // pred_check
          %p718 = pneg %p189
        $region54: #{feed_forward.1} parent=47 // pred_check_branch
          %720 = sbr.rel (%p718) target = $region56
        $region55: #{feed_forward.1} parent=47 // pred_region
          %s721 = smul.u32 2, %s19
        $region56: #{feed_forward.1} parent=47 // pred_fallthru
          _
      $region48: #{feed_forward.1} parent=5 // pred_fallthru
        _
      %p722 = scmp.le.s32.totalorder 2, %s14
      // Predicated region
      $region57: #{feed_forward.1} parent=5 // pred_check
        %p723 = pneg %p722
      $region58: #{feed_forward.1} parent=5 // pred_check_branch
        %725 = sbr.rel (%p723) target = $region60
      $region59: #{feed_forward.1} parent=5 // pred_region
        %s726 = ssub.s32 %s14, 2
        // Predicated region
        $region61: #{feed_forward.1} parent=59 // pred_check
          %p727 = pneg %p195
        $region62: #{feed_forward.1} parent=59 // pred_check_branch
          %729 = sbr.rel (%p727) target = $region64
        $region63: #{feed_forward.1} parent=59 // pred_region
          %s730 = smul.u32 2, %s20
          %p731 = scmp.lt.s32.totalorder %s730, 3
          %s732 = scalar_select %p731, %s730, 3
          %s733 = smul.addr %s732, 8
          %s734 = scalar_lea.vmem %s7, %s733
        $region64: #{feed_forward.1} parent=59 // pred_fallthru
          _
      $region60: #{feed_forward.1} parent=5 // pred_fallthru
        _
    $region6: #{feed_forward.1} parent=1 // loop_footer
      %s18 = sadd.s32 1, %s14
    $region7: #{feed_forward.1} parent=1 // loop_footer_branch
      %13 = sbr.rel target = $region3
    $region8: #{feed_forward.1} parent=1 // loop_exit
      _
    %735 = vsyncpa [#allocation3], 1
    %s736 = scalar_lea.sflag [#allocation3], 1
    %737 = vsyncpa %s736, 1

</llo_original>
